<compile_context>
chip_gen: v5e
topology: v5e:2x2
jax: 0.10.0
libtpu: 0.0.40
codegen_flags: <defaults>
</compile_context>

<pallas_src>
import functools

import jax
import jax.numpy as jnp
from jax.experimental import pallas as pl
from jax.experimental.pallas import tpu as pltpu


def _round_up(x, m):
    return ((x + m - 1) // m) * m


# ---------------------------------------------------------------------------
# Pallas kernel: fused encoder + (policy || value) head, narrow output slab
# ---------------------------------------------------------------------------
def _actor_critic_kernel(x_ref, w1_ref, b1_ref, w2_ref, b2_ref,
                         wh_ref, bh_ref, out_ref):
    x = x_ref[...]                                                 # [TM, OBS]

    # encoder: Linear(obs, 32) + ReLU
    h1 = jnp.dot(x, w1_ref[...],
                 preferred_element_type=jnp.float32,
                 precision=jax.lax.Precision.HIGHEST)
    h1 = jnp.maximum(h1 + b1_ref[...], 0.0)                        # [TM, 32]

    # encoder: Linear(32, 64) + ReLU
    h2 = jnp.dot(h1, w2_ref[...],
                 preferred_element_type=jnp.float32,
                 precision=jax.lax.Precision.HIGHEST)
    h2 = jnp.maximum(h2 + b2_ref[...], 0.0)                        # [TM, 64]

    # fused policy+value head: Linear(64, round_up(action_shape + 1, 8))
    out_ref[...] = (jnp.dot(h2, wh_ref[...],
                            preferred_element_type=jnp.float32,
                            precision=jax.lax.Precision.HIGHEST)
                    + bh_ref[...])                                 # [TM, HEAD_P]


# ---------------------------------------------------------------------------
# Parameter construction (deterministic, PyTorch-Linear-style uniform init)
# ---------------------------------------------------------------------------
def init_params(key, obs_shape, action_shape):
    def linear(key, fan_in, fan_out):
        kw, kb = jax.random.split(key)
        bound = 1.0 / jnp.sqrt(jnp.float32(fan_in))
        w = jax.random.uniform(kw, (fan_in, fan_out), jnp.float32, -bound, bound)
        b = jax.random.uniform(kb, (fan_out,), jnp.float32, -bound, bound)
        return w, b

    k1, k2, k3, k4 = jax.random.split(key, 4)
    params = {}
    params["w1"], params["b1"] = linear(k1, obs_shape, 32)
    params["w2"], params["b2"] = linear(k2, 32, 64)
    params["wp"], params["bp"] = linear(k3, 64, action_shape)
    params["wv"], params["bv"] = linear(k4, 64, 1)
    return params


# ---------------------------------------------------------------------------
# One-time parameter packing (outside the jitted forward):
#   - biases reshaped to (1, n) for 2-D VMEM blocks
#   - policy & value heads fused: [Wp | Wv], padded only to an 8-lane multiple
# ---------------------------------------------------------------------------
def pack_params(params, action_shape):
    head = action_shape + 1
    head_p = _round_up(head, 8)                # narrow head width (NOT 128)
    pad = head_p - head
    head_w = jnp.concatenate([params["wp"], params["wv"]], axis=1)   # (64, head)
    head_b = jnp.concatenate([params["bp"], params["bv"]], axis=0)   # (head,)
    head_w = jnp.pad(head_w, ((0, 0), (0, pad)))                     # (64, HEAD_P)
    head_b = jnp.pad(head_b, (0, pad)).reshape(1, head_p)            # (1,  HEAD_P)
    return {
        "w1": params["w1"],                      # (obs, 32)
        "b1": params["b1"].reshape(1, -1),       # (1, 32)
        "w2": params["w2"],                      # (32, 64)
        "b2": params["b2"].reshape(1, -1),       # (1, 64)
        "wh": head_w,                            # (64, HEAD_P)
        "bh": head_b,                            # (1,  HEAD_P)
    }


# ---------------------------------------------------------------------------
# Wrapper: row tiling + pallas_call (no input padding, partial last block)
# ---------------------------------------------------------------------------
@functools.partial(jax.jit, static_argnames=("action_shape",))
def shared_actor_critic_forward(local_obs, packed, *, action_shape):
    """local_obs: [batch, agent_num, obs_shape] float32. packed: pack_params()."""
    B, A, O = local_obs.shape
    M = B * A

    # Row tile: up to 1024 rows/step, but split so that (whenever M permits)
    # there are >= 2 grid steps for v7x's two TensorCores to share.
    TM_MAX = 1024
    M8 = _round_up(M, 8)
    TM = min(TM_MAX, max(8, _round_up(pl.cdiv(M8, 2), 8)))
    grid = pl.cdiv(M, TM)          # partial last block: reads padded, writes masked

    x = local_obs.reshape(M, O).astype(jnp.float32)   # no jnp.pad copy

    w1, b1 = packed["w1"], packed["b1"]
    w2, b2 = packed["w2"], packed["b2"]
    wh, bh = packed["wh"], packed["bh"]
    H1 = w1.shape[1]
    H2 = w2.shape[1]
    HEAD_P = wh.shape[1]

    full_spec = lambda shape: pl.BlockSpec(shape, lambda i: (0, 0))

    out = pl.pallas_call(
        _actor_critic_kernel,
        out_shape=jax.ShapeDtypeStruct((M, HEAD_P), jnp.float32),
        grid_spec=pltpu.PrefetchScalarGridSpec(
            num_scalar_prefetch=0,
            grid=(grid,),
            in_specs=[
                pl.BlockSpec((TM, O), lambda i: (i, 0)),   # x row tile (unpadded lanes)
                full_spec((O, H1)),                        # W1
                full_spec((1, H1)),                        # b1
                full_spec((H1, H2)),                       # W2
                full_spec((1, H2)),                        # b2
                full_spec((H2, HEAD_P)),                   # [Wp | Wv] (narrow)
                full_spec((1, HEAD_P)),                    # [bp | bv] (narrow)
            ],
            out_specs=pl.BlockSpec((TM, HEAD_P), lambda i: (i, 0)),
        ),
        compiler_params=pltpu.CompilerParams(
            dimension_semantics=("parallel",)),
    )(x, w1, b1, w2, b2, wh, bh)

    logit = out[:, :action_shape].reshape(B, A, action_shape)
    value = out[:, action_shape:action_shape + 1].reshape(B, A, 1)
    return {"logit": logit, "value": value}


# ---------------------------------------------------------------------------
# Pure-JAX reference for verification
# ---------------------------------------------------------------------------
def reference_forward(local_obs, params):
    x = local_obs.astype(jnp.float32)
    h1 = jnp.maximum(x @ params["w1"] + params["b1"], 0.0)
    h2 = jnp.maximum(h1 @ params["w2"] + params["b2"], 0.0)
    logit = h2 @ params["wp"] + params["bp"]
    value = h2 @ params["wv"] + params["bv"]
    return {"logit": logit, "value": value}


if __name__ == "__main__":
    batch, agent_num, obs_shape, action_shape = 2, 3, 10, 5

    key = jax.random.PRNGKey(0)
    k_params, k_obs = jax.random.split(key)
    params = init_params(k_params, obs_shape, action_shape)
    packed = pack_params(params, action_shape)          # one-time, outside jit
    local_obs = jax.random.normal(k_obs, (batch, agent_num, obs_shape),
                                  dtype=jnp.float32)

    out = shared_actor_critic_forward(local_obs, packed,
                                      action_shape=action_shape)
    out = jax.block_until_ready(out)

    ref = reference_forward(local_obs, params)
    assert out["logit"].shape == (batch, agent_num, action_shape)
    assert out["value"].shape == (batch, agent_num, 1)
    assert jnp.allclose(out["logit"], ref["logit"], atol=1e-5, rtol=1e-5)
    assert jnp.allclose(out["value"], ref["value"], atol=1e-5, rtol=1e-5)

    print("KERNEL_OK")
</pallas_src>

<mosaic_0001>
module attributes {stable_mosaic.version = 11 : i64} {
  func.func @_actor_critic_kernel(%arg0: i32, %arg1: memref<8x10xf32, #tpu.memory_space<vmem>>, %arg2: memref<10x32xf32, #tpu.memory_space<vmem>>, %arg3: memref<1x32xf32, #tpu.memory_space<vmem>>, %arg4: memref<32x64xf32, #tpu.memory_space<vmem>>, %arg5: memref<1x64xf32, #tpu.memory_space<vmem>>, %arg6: memref<64x8xf32, #tpu.memory_space<vmem>>, %arg7: memref<1x8xf32, #tpu.memory_space<vmem>>, %arg8: memref<8x8xf32, #tpu.memory_space<vmem>>) attributes {dimension_semantics = [#tpu.dimension_semantics<parallel>], iteration_bounds = array<i64: 1>, scalar_prefetch = 0 : i64, scratch_operands = 0 : i64, tpu.core_type = #tpu.core_type<tc>, window_params = [{transform_indices = @transform_0, window_bounds = array<i64: 8, 10>}, {pipeline_mode = #tpu.pipeline_mode<synchronous>, transform_indices = @transform_1, window_bounds = array<i64: 10, 32>}, {pipeline_mode = #tpu.pipeline_mode<synchronous>, transform_indices = @transform_2, window_bounds = array<i64: 1, 32>}, {pipeline_mode = #tpu.pipeline_mode<synchronous>, transform_indices = @transform_3, window_bounds = array<i64: 32, 64>}, {pipeline_mode = #tpu.pipeline_mode<synchronous>, transform_indices = @transform_4, window_bounds = array<i64: 1, 64>}, {pipeline_mode = #tpu.pipeline_mode<synchronous>, transform_indices = @transform_5, window_bounds = array<i64: 64, 8>}, {pipeline_mode = #tpu.pipeline_mode<synchronous>, transform_indices = @transform_6, window_bounds = array<i64: 1, 8>}, {transform_indices = @transform_7, window_bounds = array<i64: 8, 8>}]} {
    %c0 = arith.constant 0 : index
    %c0_0 = arith.constant 0 : index
    %0 = vector.load %arg1[%c0, %c0_0] : memref<8x10xf32, #tpu.memory_space<vmem>>, vector<8x10xf32>
    %c0_1 = arith.constant 0 : index
    %c0_2 = arith.constant 0 : index
    %1 = vector.load %arg2[%c0_1, %c0_2] : memref<10x32xf32, #tpu.memory_space<vmem>>, vector<10x32xf32>
    %cst = arith.constant dense<0.000000e+00> : vector<8x32xf32>
    %2 = tpu.matmul %0, %1, %cst {dimension_numbers = #tpu.dot_dimension_numbers<[1], [0], [0], [1], [0, 0, 1, 1], [], []>, precision = #tpu.contract_precision<fp32>} : vector<8x10xf32>, vector<10x32xf32>, vector<8x32xf32> -> vector<8x32xf32>
    %c0_3 = arith.constant 0 : index
    %c0_4 = arith.constant 0 : index
    %3 = vector.load %arg3[%c0_3, %c0_4] : memref<1x32xf32, #tpu.memory_space<vmem>>, vector<1x32xf32>
    %4 = vector.broadcast %3 : vector<1x32xf32> to vector<8x32xf32>
    %5 = arith.addf %2, %4 : vector<8x32xf32>
    %cst_5 = arith.constant 0.000000e+00 : f32
    %6 = vector.broadcast %cst_5 : f32 to vector<8x32xf32>
    %7 = arith.maximumf %5, %6 : vector<8x32xf32>
    %c0_6 = arith.constant 0 : index
    %c0_7 = arith.constant 0 : index
    %8 = vector.load %arg4[%c0_6, %c0_7] : memref<32x64xf32, #tpu.memory_space<vmem>>, vector<32x64xf32>
    %cst_8 = arith.constant dense<0.000000e+00> : vector<8x64xf32>
    %9 = tpu.matmul %7, %8, %cst_8 {dimension_numbers = #tpu.dot_dimension_numbers<[1], [0], [0], [1], [0, 0, 1, 1], [], []>, precision = #tpu.contract_precision<fp32>} : vector<8x32xf32>, vector<32x64xf32>, vector<8x64xf32> -> vector<8x64xf32>
    %c0_9 = arith.constant 0 : index
    %c0_10 = arith.constant 0 : index
    %10 = vector.load %arg5[%c0_9, %c0_10] : memref<1x64xf32, #tpu.memory_space<vmem>>, vector<1x64xf32>
    %11 = vector.broadcast %10 : vector<1x64xf32> to vector<8x64xf32>
    %12 = arith.addf %9, %11 : vector<8x64xf32>
    %cst_11 = arith.constant 0.000000e+00 : f32
    %13 = vector.broadcast %cst_11 : f32 to vector<8x64xf32>
    %14 = arith.maximumf %12, %13 : vector<8x64xf32>
    %c0_12 = arith.constant 0 : index
    %c0_13 = arith.constant 0 : index
    %15 = vector.load %arg6[%c0_12, %c0_13] : memref<64x8xf32, #tpu.memory_space<vmem>>, vector<64x8xf32>
    %cst_14 = arith.constant dense<0.000000e+00> : vector<8x8xf32>
    %16 = tpu.matmul %14, %15, %cst_14 {dimension_numbers = #tpu.dot_dimension_numbers<[1], [0], [0], [1], [0, 0, 1, 1], [], []>, precision = #tpu.contract_precision<fp32>} : vector<8x64xf32>, vector<64x8xf32>, vector<8x8xf32> -> vector<8x8xf32>
    %c0_15 = arith.constant 0 : index
    %c0_16 = arith.constant 0 : index
    %17 = vector.load %arg7[%c0_15, %c0_16] : memref<1x8xf32, #tpu.memory_space<vmem>>, vector<1x8xf32>
    %18 = vector.broadcast %17 : vector<1x8xf32> to vector<8x8xf32>
    %19 = arith.addf %16, %18 : vector<8x8xf32>
    %c0_17 = arith.constant 0 : index
    %c0_18 = arith.constant 0 : index
    %20 = vector.load %arg8[%c0_17, %c0_18] : memref<8x8xf32, #tpu.memory_space<vmem>>, vector<8x8xf32>
    tpu.vector_store %arg8[%c0_17, %c0_18], %19 {strides = array<i32>} : memref<8x8xf32, #tpu.memory_space<vmem>>, vector<8x8xf32>,
    return
  }
  func.func @transform_0(%arg0: i32) -> (i32, i32) {
    %c0_i32 = arith.constant 0 : i32
    %c0_i32_0 = arith.constant 0 : i32
    return %arg0, %c0_i32 : i32, i32
  }
  func.func @transform_1(%arg0: i32) -> (i32, i32) {
    %c0_i32 = arith.constant 0 : i32
    %c0_i32_0 = arith.constant 0 : i32
    %c0_i32_1 = arith.constant 0 : i32
    return %c0_i32, %c0_i32_0 : i32, i32
  }
  func.func @transform_2(%arg0: i32) -> (i32, i32) {
    %c0_i32 = arith.constant 0 : i32
    %c0_i32_0 = arith.constant 0 : i32
    %c0_i32_1 = arith.constant 0 : i32
    return %c0_i32, %c0_i32_0 : i32, i32
  }
  func.func @transform_3(%arg0: i32) -> (i32, i32) {
    %c0_i32 = arith.constant 0 : i32
    %c0_i32_0 = arith.constant 0 : i32
    %c0_i32_1 = arith.constant 0 : i32
    return %c0_i32, %c0_i32_0 : i32, i32
  }
  func.func @transform_4(%arg0: i32) -> (i32, i32) {
    %c0_i32 = arith.constant 0 : i32
    %c0_i32_0 = arith.constant 0 : i32
    %c0_i32_1 = arith.constant 0 : i32
    return %c0_i32, %c0_i32_0 : i32, i32
  }
  func.func @transform_5(%arg0: i32) -> (i32, i32) {
    %c0_i32 = arith.constant 0 : i32
    %c0_i32_0 = arith.constant 0 : i32
    %c0_i32_1 = arith.constant 0 : i32
    return %c0_i32, %c0_i32_0 : i32, i32
  }
  func.func @transform_6(%arg0: i32) -> (i32, i32) {
    %c0_i32 = arith.constant 0 : i32
    %c0_i32_0 = arith.constant 0 : i32
    %c0_i32_1 = arith.constant 0 : i32
    return %c0_i32, %c0_i32_0 : i32, i32
  }
  func.func @transform_7(%arg0: i32) -> (i32, i32) {
    %c0_i32 = arith.constant 0 : i32
    %c0_i32_0 = arith.constant 0 : i32
    return %arg0, %c0_i32 : i32, i32
  }
}

</mosaic_0001>

<llo_original>
// kernel: shared_actor_critic_forward.1
$region0: #{shared_actor_critic_forward.1}
  #allocation0 [shape = 'u32[]', space=smem, size = 0x4, offset = 0x4, fixed_abs, tag = 'smem constant byte address 0x4 - core index']
  #allocation1 [shape = 'u32[72,128]{1,0:T(1,128)}', space=vmem, size = 0x9000, scoped, tag = 'internal scratch']
  %s0 = inlined_call_operand.vmem [shape: f32[6,10], index: 0, kind: input, shape index: {}]
  %s1 = inlined_call_operand.vmem [shape: f32[10,32], index: 1, kind: input, shape index: {}]
  %s2 = inlined_call_operand.vmem [shape: f32[1,32], index: 2, kind: input, shape index: {}]
  %s3 = inlined_call_operand.vmem [shape: f32[32,64], index: 3, kind: input, shape index: {}]
  %s4 = inlined_call_operand.vmem [shape: f32[1,64], index: 4, kind: input, shape index: {}]
  %s5 = inlined_call_operand.vmem [shape: f32[64,8], index: 5, kind: input, shape index: {}]
  %s6 = inlined_call_operand.vmem [shape: f32[1,8], index: 6, kind: input, shape index: {}]
  %s7 = inlined_call_operand.vmem [shape: f32[6,8], index: 7, kind: output, shape index: {}]
  %s8 = sld [smem:[#allocation0]]
  $region38: #{shared_actor_critic_forward.1} parent=0
    _
  %s10 = ssub.s32 1, %s8
  %s11 = scalar_select 0, %s10, %s8
  // Predicated region
  $region2: #{shared_actor_critic_forward.1} parent=0 // pred_check
    _
  $region3: #{shared_actor_critic_forward.1} parent=0 // pred_check_branch
    %13 = sbr.rel (0) target = $region5
  $region4: #{shared_actor_critic_forward.1} parent=0 // pred_region
    _
  $region5: #{shared_actor_critic_forward.1} parent=0 // pred_fallthru
    _
  // Predicated region
  $region6: #{shared_actor_critic_forward.1} parent=0 // pred_check
    _
  $region7: #{shared_actor_critic_forward.1} parent=0 // pred_check_branch
    %15 = sbr.rel (0) target = $region9
  $region8: #{shared_actor_critic_forward.1} parent=0 // pred_region
    _
  $region9: #{shared_actor_critic_forward.1} parent=0 // pred_fallthru
    _
  // Predicated region
  $region10: #{shared_actor_critic_forward.1} parent=0 // pred_check
    _
  $region11: #{shared_actor_critic_forward.1} parent=0 // pred_check_branch
    %17 = sbr.rel (0) target = $region13
  $region12: #{shared_actor_critic_forward.1} parent=0 // pred_region
    _
  $region13: #{shared_actor_critic_forward.1} parent=0 // pred_fallthru
    _
  // Predicated region
  $region14: #{shared_actor_critic_forward.1} parent=0 // pred_check
    _
  $region15: #{shared_actor_critic_forward.1} parent=0 // pred_check_branch
    %19 = sbr.rel (0) target = $region17
  $region16: #{shared_actor_critic_forward.1} parent=0 // pred_region
    _
  $region17: #{shared_actor_critic_forward.1} parent=0 // pred_fallthru
    _
  // Predicated region
  $region18: #{shared_actor_critic_forward.1} parent=0 // pred_check
    _
  $region19: #{shared_actor_critic_forward.1} parent=0 // pred_check_branch
    %21 = sbr.rel (0) target = $region21
  $region20: #{shared_actor_critic_forward.1} parent=0 // pred_region
    _
  $region21: #{shared_actor_critic_forward.1} parent=0 // pred_fallthru
    _
  // Predicated region
  $region22: #{shared_actor_critic_forward.1} parent=0 // pred_check
    _
  $region23: #{shared_actor_critic_forward.1} parent=0 // pred_check_branch
    %23 = sbr.rel (0) target = $region25
  $region24: #{shared_actor_critic_forward.1} parent=0 // pred_region
    _
  $region25: #{shared_actor_critic_forward.1} parent=0 // pred_fallthru
    _
  // Predicated region
  $region26: #{shared_actor_critic_forward.1} parent=0 // pred_check
    _
  $region27: #{shared_actor_critic_forward.1} parent=0 // pred_check_branch
    %25 = sbr.rel (0) target = $region29
  $region28: #{shared_actor_critic_forward.1} parent=0 // pred_region
    _
  $region29: #{shared_actor_critic_forward.1} parent=0 // pred_fallthru
    _
  %v26 = vld [vmem:[%s0] sm:$0xff]
  %v27 = vld [vmem:[%s1] sm:$0xff]
  %v28 = vld [vmem:[%s1 + $0x8] sm:$0x3]
  %v29 = vld [vmem:[%s2] sm:$0x1]
  %v31 = vperm.slane %v29, 0
  %vm33 = vcmask 80896
  %v35 = vsel %vm33, %v26, 0
  %vm37 = vcmask 1041408
  %v39 = vsel %vm37, %v28, 0
  %41 = vmatpush.msra.mxu0 0.0
  %42 = vmatpush.msra.mxu0 0.0
  %43 = vmatpush.msra.mxu0 0.0
  %44 = vmatpush.msra.mxu0 0.0
  %45 = vmatpush.msra.mxu0 0.0
  %46 = vmatpush.msra.mxu0 0.0
  %47 = vmatpush.msra.mxu0 0.0
  %48 = vmatpush.msra.mxu0 0.0
  %49 = vmatpush.msra.mxu0 0.0
  %50 = vmatpush.msra.mxu0 0.0
  %51 = vmatpush.msra.mxu0 0.0
  %52 = vmatpush.msra.mxu0 0.0
  %53 = vmatpush.msra.mxu0 0.0
  %54 = vmatpush.msra.mxu0 0.0
  %v55 = vand.u32 %v39, 4294901760
  %56 = vmatpush.msra.mxu0 %v55
  %v57 = vand.u32 %v27, 4294901760
  %58 = vmatpush.msra.mxu0 %v57
  %v59 = vand.u32 %v35, 4294901760
  %v60 = vsub.f32 %v35, %v59
  %v61 = vand.u32 %v60, 4294901760
  %v62 = vsub.f32 %v60, %v61
  %v63 = vand.u32 %v62, 4294901760
  %64 = vmatmul.f32.gmra.mxu0 %v63
  %v65 = vpop.f32.mrf.mxu0
  %v66 = vadd.f32 %v31, %v65
  %67 = vdwg.mxu0
  %68 = vmatpush.msra.mxu0 0.0
  %69 = vmatpush.msra.mxu0 0.0
  %70 = vmatpush.msra.mxu0 0.0
  %71 = vmatpush.msra.mxu0 0.0
  %72 = vmatpush.msra.mxu0 0.0
  %73 = vmatpush.msra.mxu0 0.0
  %74 = vmatpush.msra.mxu0 0.0
  %75 = vmatpush.msra.mxu0 0.0
  %76 = vmatpush.msra.mxu0 0.0
  %77 = vmatpush.msra.mxu0 0.0
  %78 = vmatpush.msra.mxu0 0.0
  %79 = vmatpush.msra.mxu0 0.0
  %80 = vmatpush.msra.mxu0 0.0
  %81 = vmatpush.msra.mxu0 0.0
  %v82 = vand.u32 %v39, 4294901760
  %v83 = vsub.f32 %v39, %v82
  %v84 = vand.u32 %v83, 4294901760
  %v85 = vsub.f32 %v83, %v84
  %v86 = vand.u32 %v85, 4294901760
  %87 = vmatpush.msra.mxu0 %v86
  %v88 = vand.u32 %v27, 4294901760
  %v89 = vsub.f32 %v27, %v88
  %v90 = vand.u32 %v89, 4294901760
  %v91 = vsub.f32 %v89, %v90
  %v92 = vand.u32 %v91, 4294901760
  %93 = vmatpush.msra.mxu0 %v92
  %v94 = vand.u32 %v35, 4294901760
  %95 = vmatmul.f32.gmra.mxu0 %v94
  %v96 = vpop.f32.mrf.mxu0
  %v97 = vadd.f32 %v66, %v96
  %98 = vdwg.mxu0
  %99 = vmatpush.msra.mxu0 0.0
  %100 = vmatpush.msra.mxu0 0.0
  %101 = vmatpush.msra.mxu0 0.0
  %102 = vmatpush.msra.mxu0 0.0
  %103 = vmatpush.msra.mxu0 0.0
  %104 = vmatpush.msra.mxu0 0.0
  %105 = vmatpush.msra.mxu0 0.0
  %106 = vmatpush.msra.mxu0 0.0
  %107 = vmatpush.msra.mxu0 0.0
  %108 = vmatpush.msra.mxu0 0.0
  %109 = vmatpush.msra.mxu0 0.0
  %110 = vmatpush.msra.mxu0 0.0
  %111 = vmatpush.msra.mxu0 0.0
  %112 = vmatpush.msra.mxu0 0.0
  %v113 = vand.u32 %v39, 4294901760
  %v114 = vsub.f32 %v39, %v113
  %115 = vmatpush.msra.mxu0 %v114
  %v116 = vand.u32 %v27, 4294901760
  %v117 = vsub.f32 %v27, %v116
  %118 = vmatpush.msra.mxu0 %v117
  %v119 = vand.u32 %v35, 4294901760
  %v120 = vsub.f32 %v35, %v119
  %121 = vmatmul.f32.gmra.mxu0 %v120
  %v122 = vpop.f32.mrf.mxu0
  %v123 = vadd.f32 %v97, %v122
  %124 = vdwg.mxu0
  %125 = vmatpush.msra.mxu0 0.0
  %126 = vmatpush.msra.mxu0 0.0
  %127 = vmatpush.msra.mxu0 0.0
  %128 = vmatpush.msra.mxu0 0.0
  %129 = vmatpush.msra.mxu0 0.0
  %130 = vmatpush.msra.mxu0 0.0
  %131 = vmatpush.msra.mxu0 0.0
  %132 = vmatpush.msra.mxu0 0.0
  %133 = vmatpush.msra.mxu0 0.0
  %134 = vmatpush.msra.mxu0 0.0
  %135 = vmatpush.msra.mxu0 0.0
  %136 = vmatpush.msra.mxu0 0.0
  %137 = vmatpush.msra.mxu0 0.0
  %138 = vmatpush.msra.mxu0 0.0
  %v139 = vand.u32 %v39, 4294901760
  %140 = vmatpush.msra.mxu0 %v139
  %v141 = vand.u32 %v27, 4294901760
  %142 = vmatpush.msra.mxu0 %v141
  %v143 = vand.u32 %v35, 4294901760
  %v144 = vsub.f32 %v35, %v143
  %v145 = vand.u32 %v144, 4294901760
  %146 = vmatmul.f32.gmra.mxu0 %v145
  %v147 = vpop.f32.mrf.mxu0
  %v148 = vadd.f32 %v123, %v147
  %149 = vdwg.mxu0
  %150 = vmatpush.msra.mxu0 0.0
  %151 = vmatpush.msra.mxu0 0.0
  %152 = vmatpush.msra.mxu0 0.0
  %153 = vmatpush.msra.mxu0 0.0
  %154 = vmatpush.msra.mxu0 0.0
  %155 = vmatpush.msra.mxu0 0.0
  %156 = vmatpush.msra.mxu0 0.0
  %157 = vmatpush.msra.mxu0 0.0
  %158 = vmatpush.msra.mxu0 0.0
  %159 = vmatpush.msra.mxu0 0.0
  %160 = vmatpush.msra.mxu0 0.0
  %161 = vmatpush.msra.mxu0 0.0
  %162 = vmatpush.msra.mxu0 0.0
  %163 = vmatpush.msra.mxu0 0.0
  %v164 = vand.u32 %v39, 4294901760
  %v165 = vsub.f32 %v39, %v164
  %v166 = vand.u32 %v165, 4294901760
  %167 = vmatpush.msra.mxu0 %v166
  %v168 = vand.u32 %v27, 4294901760
  %v169 = vsub.f32 %v27, %v168
  %v170 = vand.u32 %v169, 4294901760
  %171 = vmatpush.msra.mxu0 %v170
  %v172 = vand.u32 %v35, 4294901760
  %173 = vmatmul.f32.gmra.mxu0 %v172
  %v174 = vpop.f32.mrf.mxu0
  %v175 = vadd.f32 %v148, %v174
  %176 = vdwg.mxu0
  %177 = vmatpush.msra.mxu0 0.0
  %178 = vmatpush.msra.mxu0 0.0
  %179 = vmatpush.msra.mxu0 0.0
  %180 = vmatpush.msra.mxu0 0.0
  %181 = vmatpush.msra.mxu0 0.0
  %182 = vmatpush.msra.mxu0 0.0
  %183 = vmatpush.msra.mxu0 0.0
  %184 = vmatpush.msra.mxu0 0.0
  %185 = vmatpush.msra.mxu0 0.0
  %186 = vmatpush.msra.mxu0 0.0
  %187 = vmatpush.msra.mxu0 0.0
  %188 = vmatpush.msra.mxu0 0.0
  %189 = vmatpush.msra.mxu0 0.0
  %190 = vmatpush.msra.mxu0 0.0
  %v191 = vand.u32 %v39, 4294901760
  %192 = vmatpush.msra.mxu0 %v191
  %v193 = vand.u32 %v27, 4294901760
  %194 = vmatpush.msra.mxu0 %v193
  %v195 = vand.u32 %v35, 4294901760
  %196 = vmatmul.f32.gmra.mxu0 %v195
  %v197 = vpop.f32.mrf.mxu0
  %v198 = vadd.f32 %v175, %v197
  %199 = vdwg.mxu0
  %v200 = vmax.f32 %v198, 0.0
  %v201 = vld [vmem:[%s3] sm:$0xff]
  %v202 = vld [vmem:[%s3 + $0x8] sm:$0xff]
  %v203 = vld [vmem:[%s3 + $0x10] sm:$0xff]
  %v204 = vld [vmem:[%s3 + $0x18] sm:$0xff]
  %v205 = vld [vmem:[%s4] sm:$0x1]
  %v207 = vperm.slane %v205, 0
  %vm209 = vcmask 261120
  %v211 = vsel %vm209, %v200, 0
  %213 = vmatpush.msra.mxu0 0.0
  %214 = vmatpush.msra.mxu0 0.0
  %215 = vmatpush.msra.mxu0 0.0
  %216 = vmatpush.msra.mxu0 0.0
  %217 = vmatpush.msra.mxu0 0.0
  %218 = vmatpush.msra.mxu0 0.0
  %219 = vmatpush.msra.mxu0 0.0
  %220 = vmatpush.msra.mxu0 0.0
  %221 = vmatpush.msra.mxu0 0.0
  %222 = vmatpush.msra.mxu0 0.0
  %223 = vmatpush.msra.mxu0 0.0
  %224 = vmatpush.msra.mxu0 0.0
  %v225 = vand.u32 %v204, 4294901760
  %226 = vmatpush.msra.mxu0 %v225
  %v227 = vand.u32 %v203, 4294901760
  %228 = vmatpush.msra.mxu0 %v227
  %v229 = vand.u32 %v202, 4294901760
  %230 = vmatpush.msra.mxu0 %v229
  %v231 = vand.u32 %v201, 4294901760
  %232 = vmatpush.msra.mxu0 %v231
  %v233 = vand.u32 %v211, 4294901760
  %v234 = vsub.f32 %v211, %v233
  %v235 = vand.u32 %v234, 4294901760
  %v236 = vsub.f32 %v234, %v235
  %v237 = vand.u32 %v236, 4294901760
  %238 = vmatmul.f32.gmra.mxu0 %v237
  %v239 = vpop.f32.mrf.mxu0
  %v240 = vadd.f32 %v207, %v239
  %241 = vdwg.mxu0
  %242 = vmatpush.msra.mxu0 0.0
  %243 = vmatpush.msra.mxu0 0.0
  %244 = vmatpush.msra.mxu0 0.0
  %245 = vmatpush.msra.mxu0 0.0
  %246 = vmatpush.msra.mxu0 0.0
  %247 = vmatpush.msra.mxu0 0.0
  %248 = vmatpush.msra.mxu0 0.0
  %249 = vmatpush.msra.mxu0 0.0
  %250 = vmatpush.msra.mxu0 0.0
  %251 = vmatpush.msra.mxu0 0.0
  %252 = vmatpush.msra.mxu0 0.0
  %253 = vmatpush.msra.mxu0 0.0
  %v254 = vand.u32 %v204, 4294901760
  %v255 = vsub.f32 %v204, %v254
  %v256 = vand.u32 %v255, 4294901760
  %v257 = vsub.f32 %v255, %v256
  %v258 = vand.u32 %v257, 4294901760
  %259 = vmatpush.msra.mxu0 %v258
  %v260 = vand.u32 %v203, 4294901760
  %v261 = vsub.f32 %v203, %v260
  %v262 = vand.u32 %v261, 4294901760
  %v263 = vsub.f32 %v261, %v262
  %v264 = vand.u32 %v263, 4294901760
  %265 = vmatpush.msra.mxu0 %v264
  %v266 = vand.u32 %v202, 4294901760
  %v267 = vsub.f32 %v202, %v266
  %v268 = vand.u32 %v267, 4294901760
  %v269 = vsub.f32 %v267, %v268
  %v270 = vand.u32 %v269, 4294901760
  %271 = vmatpush.msra.mxu0 %v270
  %v272 = vand.u32 %v201, 4294901760
  %v273 = vsub.f32 %v201, %v272
  %v274 = vand.u32 %v273, 4294901760
  %v275 = vsub.f32 %v273, %v274
  %v276 = vand.u32 %v275, 4294901760
  %277 = vmatpush.msra.mxu0 %v276
  %v278 = vand.u32 %v211, 4294901760
  %279 = vmatmul.f32.gmra.mxu0 %v278
  %v280 = vpop.f32.mrf.mxu0
  %v281 = vadd.f32 %v240, %v280
  %282 = vdwg.mxu0
  %283 = vmatpush.msra.mxu0 0.0
  %284 = vmatpush.msra.mxu0 0.0
  %285 = vmatpush.msra.mxu0 0.0
  %286 = vmatpush.msra.mxu0 0.0
  %287 = vmatpush.msra.mxu0 0.0
  %288 = vmatpush.msra.mxu0 0.0
  %289 = vmatpush.msra.mxu0 0.0
  %290 = vmatpush.msra.mxu0 0.0
  %291 = vmatpush.msra.mxu0 0.0
  %292 = vmatpush.msra.mxu0 0.0
  %293 = vmatpush.msra.mxu0 0.0
  %294 = vmatpush.msra.mxu0 0.0
  %v295 = vand.u32 %v204, 4294901760
  %v296 = vsub.f32 %v204, %v295
  %297 = vmatpush.msra.mxu0 %v296
  %v298 = vand.u32 %v203, 4294901760
  %v299 = vsub.f32 %v203, %v298
  %300 = vmatpush.msra.mxu0 %v299
  %v301 = vand.u32 %v202, 4294901760
  %v302 = vsub.f32 %v202, %v301
  %303 = vmatpush.msra.mxu0 %v302
  %v304 = vand.u32 %v201, 4294901760
  %v305 = vsub.f32 %v201, %v304
  %306 = vmatpush.msra.mxu0 %v305
  %v307 = vand.u32 %v211, 4294901760
  %v308 = vsub.f32 %v211, %v307
  %309 = vmatmul.f32.gmra.mxu0 %v308
  %v310 = vpop.f32.mrf.mxu0
  %v311 = vadd.f32 %v281, %v310
  %312 = vdwg.mxu0
  %313 = vmatpush.msra.mxu0 0.0
  %314 = vmatpush.msra.mxu0 0.0
  %315 = vmatpush.msra.mxu0 0.0
  %316 = vmatpush.msra.mxu0 0.0
  %317 = vmatpush.msra.mxu0 0.0
  %318 = vmatpush.msra.mxu0 0.0
  %319 = vmatpush.msra.mxu0 0.0
  %320 = vmatpush.msra.mxu0 0.0
  %321 = vmatpush.msra.mxu0 0.0
  %322 = vmatpush.msra.mxu0 0.0
  %323 = vmatpush.msra.mxu0 0.0
  %324 = vmatpush.msra.mxu0 0.0
  %v325 = vand.u32 %v204, 4294901760
  %326 = vmatpush.msra.mxu0 %v325
  %v327 = vand.u32 %v203, 4294901760
  %328 = vmatpush.msra.mxu0 %v327
  %v329 = vand.u32 %v202, 4294901760
  %330 = vmatpush.msra.mxu0 %v329
  %v331 = vand.u32 %v201, 4294901760
  %332 = vmatpush.msra.mxu0 %v331
  %v333 = vand.u32 %v211, 4294901760
  %v334 = vsub.f32 %v211, %v333
  %v335 = vand.u32 %v334, 4294901760
  %336 = vmatmul.f32.gmra.mxu0 %v335
  %v337 = vpop.f32.mrf.mxu0
  %v338 = vadd.f32 %v311, %v337
  %339 = vdwg.mxu0
  %340 = vmatpush.msra.mxu0 0.0
  %341 = vmatpush.msra.mxu0 0.0
  %342 = vmatpush.msra.mxu0 0.0
  %343 = vmatpush.msra.mxu0 0.0
  %344 = vmatpush.msra.mxu0 0.0
  %345 = vmatpush.msra.mxu0 0.0
  %346 = vmatpush.msra.mxu0 0.0
  %347 = vmatpush.msra.mxu0 0.0
  %348 = vmatpush.msra.mxu0 0.0
  %349 = vmatpush.msra.mxu0 0.0
  %350 = vmatpush.msra.mxu0 0.0
  %351 = vmatpush.msra.mxu0 0.0
  %v352 = vand.u32 %v204, 4294901760
  %v353 = vsub.f32 %v204, %v352
  %v354 = vand.u32 %v353, 4294901760
  %355 = vmatpush.msra.mxu0 %v354
  %v356 = vand.u32 %v203, 4294901760
  %v357 = vsub.f32 %v203, %v356
  %v358 = vand.u32 %v357, 4294901760
  %359 = vmatpush.msra.mxu0 %v358
  %v360 = vand.u32 %v202, 4294901760
  %v361 = vsub.f32 %v202, %v360
  %v362 = vand.u32 %v361, 4294901760
  %363 = vmatpush.msra.mxu0 %v362
  %v364 = vand.u32 %v201, 4294901760
  %v365 = vsub.f32 %v201, %v364
  %v366 = vand.u32 %v365, 4294901760
  %367 = vmatpush.msra.mxu0 %v366
  %v368 = vand.u32 %v211, 4294901760
  %369 = vmatmul.f32.gmra.mxu0 %v368
  %v370 = vpop.f32.mrf.mxu0
  %v371 = vadd.f32 %v338, %v370
  %372 = vdwg.mxu0
  %373 = vmatpush.msra.mxu0 0.0
  %374 = vmatpush.msra.mxu0 0.0
  %375 = vmatpush.msra.mxu0 0.0
  %376 = vmatpush.msra.mxu0 0.0
  %377 = vmatpush.msra.mxu0 0.0
  %378 = vmatpush.msra.mxu0 0.0
  %379 = vmatpush.msra.mxu0 0.0
  %380 = vmatpush.msra.mxu0 0.0
  %381 = vmatpush.msra.mxu0 0.0
  %382 = vmatpush.msra.mxu0 0.0
  %383 = vmatpush.msra.mxu0 0.0
  %384 = vmatpush.msra.mxu0 0.0
  %v385 = vand.u32 %v204, 4294901760
  %386 = vmatpush.msra.mxu0 %v385
  %v387 = vand.u32 %v203, 4294901760
  %388 = vmatpush.msra.mxu0 %v387
  %v389 = vand.u32 %v202, 4294901760
  %390 = vmatpush.msra.mxu0 %v389
  %v391 = vand.u32 %v201, 4294901760
  %392 = vmatpush.msra.mxu0 %v391
  %v393 = vand.u32 %v211, 4294901760
  %394 = vmatmul.f32.gmra.mxu0 %v393
  %v395 = vpop.f32.mrf.mxu0
  %v396 = vadd.f32 %v371, %v395
  %397 = vdwg.mxu0
  %v398 = vmax.f32 %v396, 0.0
  %v399 = vld [vmem:[%s5] sm:$0xff]
  %v400 = vld [vmem:[%s5 + $0x8] sm:$0xff]
  %v401 = vld [vmem:[%s5 + $0x10] sm:$0xff]
  %v402 = vld [vmem:[%s5 + $0x18] sm:$0xff]
  %v403 = vld [vmem:[%s5 + $0x20] sm:$0xff]
  %v404 = vld [vmem:[%s5 + $0x28] sm:$0xff]
  %v405 = vld [vmem:[%s5 + $0x30] sm:$0xff]
  %v406 = vld [vmem:[%s5 + $0x38] sm:$0xff]
  %v407 = vld [vmem:[%s6] sm:$0x1]
  %v409 = vperm.slane %v407, 0
  %vm411 = vcmask 523264
  %v413 = vsel %vm411, %v398, 0
  %415 = vmatpush.msra.mxu0 0.0
  %416 = vmatpush.msra.mxu0 0.0
  %417 = vmatpush.msra.mxu0 0.0
  %418 = vmatpush.msra.mxu0 0.0
  %419 = vmatpush.msra.mxu0 0.0
  %420 = vmatpush.msra.mxu0 0.0
  %421 = vmatpush.msra.mxu0 0.0
  %422 = vmatpush.msra.mxu0 0.0
  %v423 = vand.u32 %v406, 4294901760
  %424 = vmatpush.msra.mxu0 %v423
  %v425 = vand.u32 %v405, 4294901760
  %426 = vmatpush.msra.mxu0 %v425
  %v427 = vand.u32 %v404, 4294901760
  %428 = vmatpush.msra.mxu0 %v427
  %v429 = vand.u32 %v403, 4294901760
  %430 = vmatpush.msra.mxu0 %v429
  %v431 = vand.u32 %v402, 4294901760
  %432 = vmatpush.msra.mxu0 %v431
  %v433 = vand.u32 %v401, 4294901760
  %434 = vmatpush.msra.mxu0 %v433
  %v435 = vand.u32 %v400, 4294901760
  %436 = vmatpush.msra.mxu0 %v435
  %v437 = vand.u32 %v399, 4294901760
  %438 = vmatpush.msra.mxu0 %v437
  %v439 = vand.u32 %v413, 4294901760
  %v440 = vsub.f32 %v413, %v439
  %v441 = vand.u32 %v440, 4294901760
  %v442 = vsub.f32 %v440, %v441
  %v443 = vand.u32 %v442, 4294901760
  %444 = vmatmul.f32.gmra.mxu0 %v443
  %v445 = vpop.f32.mrf.mxu0
  %v446 = vadd.f32 %v409, %v445
  %447 = vdwg.mxu0
  %448 = vmatpush.msra.mxu0 0.0
  %449 = vmatpush.msra.mxu0 0.0
  %450 = vmatpush.msra.mxu0 0.0
  %451 = vmatpush.msra.mxu0 0.0
  %452 = vmatpush.msra.mxu0 0.0
  %453 = vmatpush.msra.mxu0 0.0
  %454 = vmatpush.msra.mxu0 0.0
  %455 = vmatpush.msra.mxu0 0.0
  %v456 = vand.u32 %v406, 4294901760
  %v457 = vsub.f32 %v406, %v456
  %v458 = vand.u32 %v457, 4294901760
  %v459 = vsub.f32 %v457, %v458
  %v460 = vand.u32 %v459, 4294901760
  %461 = vmatpush.msra.mxu0 %v460
  %v462 = vand.u32 %v405, 4294901760
  %v463 = vsub.f32 %v405, %v462
  %v464 = vand.u32 %v463, 4294901760
  %v465 = vsub.f32 %v463, %v464
  %v466 = vand.u32 %v465, 4294901760
  %467 = vmatpush.msra.mxu0 %v466
  %v468 = vand.u32 %v404, 4294901760
  %v469 = vsub.f32 %v404, %v468
  %v470 = vand.u32 %v469, 4294901760
  %v471 = vsub.f32 %v469, %v470
  %v472 = vand.u32 %v471, 4294901760
  %473 = vmatpush.msra.mxu0 %v472
  %v474 = vand.u32 %v403, 4294901760
  %v475 = vsub.f32 %v403, %v474
  %v476 = vand.u32 %v475, 4294901760
  %v477 = vsub.f32 %v475, %v476
  %v478 = vand.u32 %v477, 4294901760
  %479 = vmatpush.msra.mxu0 %v478
  %v480 = vand.u32 %v402, 4294901760
  %v481 = vsub.f32 %v402, %v480
  %v482 = vand.u32 %v481, 4294901760
  %v483 = vsub.f32 %v481, %v482
  %v484 = vand.u32 %v483, 4294901760
  %485 = vmatpush.msra.mxu0 %v484
  %v486 = vand.u32 %v401, 4294901760
  %v487 = vsub.f32 %v401, %v486
  %v488 = vand.u32 %v487, 4294901760
  %v489 = vsub.f32 %v487, %v488
  %v490 = vand.u32 %v489, 4294901760
  %491 = vmatpush.msra.mxu0 %v490
  %v492 = vand.u32 %v400, 4294901760
  %v493 = vsub.f32 %v400, %v492
  %v494 = vand.u32 %v493, 4294901760
  %v495 = vsub.f32 %v493, %v494
  %v496 = vand.u32 %v495, 4294901760
  %497 = vmatpush.msra.mxu0 %v496
  %v498 = vand.u32 %v399, 4294901760
  %v499 = vsub.f32 %v399, %v498
  %v500 = vand.u32 %v499, 4294901760
  %v501 = vsub.f32 %v499, %v500
  %v502 = vand.u32 %v501, 4294901760
  %503 = vmatpush.msra.mxu0 %v502
  %v504 = vand.u32 %v413, 4294901760
  %505 = vmatmul.f32.gmra.mxu0 %v504
  %v506 = vpop.f32.mrf.mxu0
  %v507 = vadd.f32 %v446, %v506
  %508 = vdwg.mxu0
  %509 = vmatpush.msra.mxu0 0.0
  %510 = vmatpush.msra.mxu0 0.0
  %511 = vmatpush.msra.mxu0 0.0
  %512 = vmatpush.msra.mxu0 0.0
  %513 = vmatpush.msra.mxu0 0.0
  %514 = vmatpush.msra.mxu0 0.0
  %515 = vmatpush.msra.mxu0 0.0
  %516 = vmatpush.msra.mxu0 0.0
  %v517 = vand.u32 %v406, 4294901760
  %v518 = vsub.f32 %v406, %v517
  %519 = vmatpush.msra.mxu0 %v518
  %v520 = vand.u32 %v405, 4294901760
  %v521 = vsub.f32 %v405, %v520
  %522 = vmatpush.msra.mxu0 %v521
  %v523 = vand.u32 %v404, 4294901760
  %v524 = vsub.f32 %v404, %v523
  %525 = vmatpush.msra.mxu0 %v524
  %v526 = vand.u32 %v403, 4294901760
  %v527 = vsub.f32 %v403, %v526
  %528 = vmatpush.msra.mxu0 %v527
  %v529 = vand.u32 %v402, 4294901760
  %v530 = vsub.f32 %v402, %v529
  %531 = vmatpush.msra.mxu0 %v530
  %v532 = vand.u32 %v401, 4294901760
  %v533 = vsub.f32 %v401, %v532
  %534 = vmatpush.msra.mxu0 %v533
  %v535 = vand.u32 %v400, 4294901760
  %v536 = vsub.f32 %v400, %v535
  %537 = vmatpush.msra.mxu0 %v536
  %v538 = vand.u32 %v399, 4294901760
  %v539 = vsub.f32 %v399, %v538
  %540 = vmatpush.msra.mxu0 %v539
  %v541 = vand.u32 %v413, 4294901760
  %v542 = vsub.f32 %v413, %v541
  %543 = vmatmul.f32.gmra.mxu0 %v542
  %v544 = vpop.f32.mrf.mxu0
  %v545 = vadd.f32 %v507, %v544
  %546 = vdwg.mxu0
  %547 = vmatpush.msra.mxu0 0.0
  %548 = vmatpush.msra.mxu0 0.0
  %549 = vmatpush.msra.mxu0 0.0
  %550 = vmatpush.msra.mxu0 0.0
  %551 = vmatpush.msra.mxu0 0.0
  %552 = vmatpush.msra.mxu0 0.0
  %553 = vmatpush.msra.mxu0 0.0
  %554 = vmatpush.msra.mxu0 0.0
  %v555 = vand.u32 %v406, 4294901760
  %556 = vmatpush.msra.mxu0 %v555
  %v557 = vand.u32 %v405, 4294901760
  %558 = vmatpush.msra.mxu0 %v557
  %v559 = vand.u32 %v404, 4294901760
  %560 = vmatpush.msra.mxu0 %v559
  %v561 = vand.u32 %v403, 4294901760
  %562 = vmatpush.msra.mxu0 %v561
  %v563 = vand.u32 %v402, 4294901760
  %564 = vmatpush.msra.mxu0 %v563
  %v565 = vand.u32 %v401, 4294901760
  %566 = vmatpush.msra.mxu0 %v565
  %v567 = vand.u32 %v400, 4294901760
  %568 = vmatpush.msra.mxu0 %v567
  %v569 = vand.u32 %v399, 4294901760
  %570 = vmatpush.msra.mxu0 %v569
  %v571 = vand.u32 %v413, 4294901760
  %v572 = vsub.f32 %v413, %v571
  %v573 = vand.u32 %v572, 4294901760
  %574 = vmatmul.f32.gmra.mxu0 %v573
  %v575 = vpop.f32.mrf.mxu0
  %v576 = vadd.f32 %v545, %v575
  %577 = vdwg.mxu0
  %578 = vmatpush.msra.mxu0 0.0
  %579 = vmatpush.msra.mxu0 0.0
  %580 = vmatpush.msra.mxu0 0.0
  %581 = vmatpush.msra.mxu0 0.0
  %582 = vmatpush.msra.mxu0 0.0
  %583 = vmatpush.msra.mxu0 0.0
  %584 = vmatpush.msra.mxu0 0.0
  %585 = vmatpush.msra.mxu0 0.0
  %v586 = vand.u32 %v406, 4294901760
  %v587 = vsub.f32 %v406, %v586
  %v588 = vand.u32 %v587, 4294901760
  %589 = vmatpush.msra.mxu0 %v588
  %v590 = vand.u32 %v405, 4294901760
  %v591 = vsub.f32 %v405, %v590
  %v592 = vand.u32 %v591, 4294901760
  %593 = vmatpush.msra.mxu0 %v592
  %v594 = vand.u32 %v404, 4294901760
  %v595 = vsub.f32 %v404, %v594
  %v596 = vand.u32 %v595, 4294901760
  %597 = vmatpush.msra.mxu0 %v596
  %v598 = vand.u32 %v403, 4294901760
  %v599 = vsub.f32 %v403, %v598
  %v600 = vand.u32 %v599, 4294901760
  %601 = vmatpush.msra.mxu0 %v600
  %v602 = vand.u32 %v402, 4294901760
  %v603 = vsub.f32 %v402, %v602
  %v604 = vand.u32 %v603, 4294901760
  %605 = vmatpush.msra.mxu0 %v604
  %v606 = vand.u32 %v401, 4294901760
  %v607 = vsub.f32 %v401, %v606
  %v608 = vand.u32 %v607, 4294901760
  %609 = vmatpush.msra.mxu0 %v608
  %v610 = vand.u32 %v400, 4294901760
  %v611 = vsub.f32 %v400, %v610
  %v612 = vand.u32 %v611, 4294901760
  %613 = vmatpush.msra.mxu0 %v612
  %v614 = vand.u32 %v399, 4294901760
  %v615 = vsub.f32 %v399, %v614
  %v616 = vand.u32 %v615, 4294901760
  %617 = vmatpush.msra.mxu0 %v616
  %v618 = vand.u32 %v413, 4294901760
  %619 = vmatmul.f32.gmra.mxu0 %v618
  %v620 = vpop.f32.mrf.mxu0
  %v621 = vadd.f32 %v576, %v620
  %622 = vdwg.mxu0
  %623 = vmatpush.msra.mxu0 0.0
  %624 = vmatpush.msra.mxu0 0.0
  %625 = vmatpush.msra.mxu0 0.0
  %626 = vmatpush.msra.mxu0 0.0
  %627 = vmatpush.msra.mxu0 0.0
  %628 = vmatpush.msra.mxu0 0.0
  %629 = vmatpush.msra.mxu0 0.0
  %630 = vmatpush.msra.mxu0 0.0
  %v631 = vand.u32 %v406, 4294901760
  %632 = vmatpush.msra.mxu0 %v631
  %v633 = vand.u32 %v405, 4294901760
  %634 = vmatpush.msra.mxu0 %v633
  %v635 = vand.u32 %v404, 4294901760
  %636 = vmatpush.msra.mxu0 %v635
  %v637 = vand.u32 %v403, 4294901760
  %638 = vmatpush.msra.mxu0 %v637
  %v639 = vand.u32 %v402, 4294901760
  %640 = vmatpush.msra.mxu0 %v639
  %v641 = vand.u32 %v401, 4294901760
  %642 = vmatpush.msra.mxu0 %v641
  %v643 = vand.u32 %v400, 4294901760
  %644 = vmatpush.msra.mxu0 %v643
  %v645 = vand.u32 %v399, 4294901760
  %646 = vmatpush.msra.mxu0 %v645
  %v647 = vand.u32 %v413, 4294901760
  %648 = vmatmul.f32.gmra.mxu0 %v647
  %v649 = vpop.f32.mrf.mxu0
  %v650 = vadd.f32 %v621, %v649
  %651 = vdwg.mxu0
  %vm652 = vcmask 64512
  %653 = vst.msk [vmem:[%s7] sm:$0xff] %vm652, %v650
  // Predicated region
  $region30: #{shared_actor_critic_forward.1} parent=0 // pred_check
    _
  $region31: #{shared_actor_critic_forward.1} parent=0 // pred_check_branch
    %655 = sbr.rel (0) target = $region33
  $region32: #{shared_actor_critic_forward.1} parent=0 // pred_region
    _
  $region33: #{shared_actor_critic_forward.1} parent=0 // pred_fallthru
    _
  // Predicated region
  $region34: #{shared_actor_critic_forward.1} parent=0 // pred_check
    _
  $region35: #{shared_actor_critic_forward.1} parent=0 // pred_check_branch
    %657 = sbr.rel (0) target = $region37
  $region36: #{shared_actor_critic_forward.1} parent=0 // pred_region
    _
  $region37: #{shared_actor_critic_forward.1} parent=0 // pred_fallthru
    _

</llo_original>
